<compile_context>
chip_gen: v7x
topology: tpu7x:2x2x1
jax: 0.10.0
libtpu: 0.0.40
codegen_flags: <defaults>
</compile_context>

<pallas_src>
import jax
import jax.numpy as jnp
from jax.experimental import pallas as pl
from jax.experimental.pallas import tpu as pltpu


def _round_up(x, m):
    return ((x + m - 1) // m) * m


def _ce_rowloss_kernel(pred_ref, label_ref, out_ref):
    # pred_ref: (TB, C) float, label_ref: (TB, 1) int32, out_ref: (TB, 1) f32
    pred = pred_ref[...].astype(jnp.float32)            # (TB, C)
    labels = label_ref[...]                             # (TB, 1) int32
    tb, c = pred.shape

    # Numerically stable log-softmax pieces, all row-local.
    row_max = jnp.max(pred, axis=-1, keepdims=True)     # (TB, 1)
    shifted = pred - row_max                            # (TB, C)

    # Fused gather: logsumexp(pred) - pred[label] == log(sum(exp(shifted))) - shifted[label],
    # so the row_max terms cancel and no separate one-hot float multiply is needed.
    col_ids = jax.lax.broadcasted_iota(jnp.int32, (tb, c), 1)
    picked = jnp.sum(jnp.where(col_ids == labels, shifted, 0.0),
                     axis=-1, keepdims=True)            # (TB, 1)
    lse = jnp.log(jnp.sum(jnp.exp(shifted), axis=-1, keepdims=True))  # (TB, 1)

    out_ref[...] = lse - picked                         # per-row CE loss


def cls_loss(pred, label, *, max_tile_b=512):
    """pred: (B, nclass) float array (f32 or bf16), label: (B,) int array -> scalar f32 loss."""
    B, C = pred.shape
    label2d = label.astype(jnp.int32).reshape(B, 1)

    # Pad the batch to a sublane multiple of 8 so (TB, C) blocks are layout-legal.
    Bp = _round_up(B, 8)
    if Bp != B:
        pred = jnp.pad(pred, ((0, Bp - B), (0, 0)))
        label2d = jnp.pad(label2d, ((0, Bp - B), (0, 0)))

    TB = min(Bp, _round_up(max_tile_b, 8))
    grid = (pl.cdiv(Bp, TB),)

    row_loss = pl.pallas_call(
        _ce_rowloss_kernel,
        out_shape=jax.ShapeDtypeStruct((Bp, 1), jnp.float32),
        grid=grid,
        in_specs=[
            pl.BlockSpec((TB, C), lambda i: (i, 0)),
            pl.BlockSpec((TB, 1), lambda i: (i, 0)),
        ],
        out_specs=pl.BlockSpec((TB, 1), lambda i: (i, 0)),
        compiler_params=pltpu.CompilerParams(
            dimension_semantics=("parallel",),          # tiles are independent -> both TCs on v7x
            vmem_limit_bytes=32 * 1024 * 1024,          # safe on v5e/v6e/v7x; plenty for TB<=512
        ),
    )(pred, label2d)

    # Global mean over the *valid* rows only (padded rows are sliced off).
    return jnp.sum(row_loss[:B, 0]) / jnp.float32(B)


def _reference_loss(pred, label):
    # Same math as torch.nn.CrossEntropyLoss (mean reduction) in plain JAX.
    return jnp.mean(
        jax.nn.logsumexp(pred.astype(jnp.float32), axis=-1)
        - jnp.take_along_axis(pred.astype(jnp.float32), label[:, None], axis=-1)[:, 0]
    )


if __name__ == "__main__":
    key = jax.random.PRNGKey(0)
    k1, k2, k3, k4 = jax.random.split(key, 4)

    # Case 1: ModelNet-style head, B multiple of 8, single tile.
    B, NCLASS = 8, 40
    pred = jax.random.normal(k1, (B, NCLASS), dtype=jnp.float32)
    label = jax.random.randint(k2, (B,), 0, NCLASS, dtype=jnp.int32)

    loss = cls_loss(pred, label)
    jax.block_until_ready(loss)
    ref = _reference_loss(pred, label)
    assert jnp.allclose(loss, ref, atol=1e-5, rtol=1e-5), (loss, ref)

    # Case 2: non-multiple-of-8 batch with a small tile -> multiple grid steps + padded tail.
    B2, NCLASS2 = 50, 40
    pred2 = jax.random.normal(k3, (B2, NCLASS2), dtype=jnp.float32)
    label2 = jax.random.randint(k4, (B2,), 0, NCLASS2, dtype=jnp.int32)

    loss2 = cls_loss(pred2, label2, max_tile_b=16)
    jax.block_until_ready(loss2)
    ref2 = _reference_loss(pred2, label2)
    assert jnp.allclose(loss2, ref2, atol=1e-5, rtol=1e-5), (loss2, ref2)

    print("KERNEL_OK")
</pallas_src>

<mosaic_0001>
module attributes {stable_mosaic.version = 11 : i64} {
  func.func @_ce_rowloss_kernel(%arg0: i32, %arg1: memref<8x40xf32, #tpu.memory_space<vmem>>, %arg2: memref<8x1xi32, #tpu.memory_space<vmem>>, %arg3: memref<8x1xf32, #tpu.memory_space<vmem>>) attributes {dimension_semantics = [#tpu.dimension_semantics<parallel>], iteration_bounds = array<i64: 1>, scalar_prefetch = 0 : i64, scratch_operands = 0 : i64, tpu.core_type = #tpu.core_type<tc>, window_params = [{transform_indices = @transform_0, window_bounds = array<i64: 8, 40>}, {transform_indices = @transform_1, window_bounds = array<i64: 8, 1>}, {transform_indices = @transform_2, window_bounds = array<i64: 8, 1>}]} {
    %c0 = arith.constant 0 : index
    %c0_0 = arith.constant 0 : index
    %0 = vector.load %arg1[%c0, %c0_0] : memref<8x40xf32, #tpu.memory_space<vmem>>, vector<8x40xf32>
    %c0_1 = arith.constant 0 : index
    %c0_2 = arith.constant 0 : index
    %1 = vector.load %arg2[%c0_1, %c0_2] : memref<8x1xi32, #tpu.memory_space<vmem>>, vector<8x1xi32>
    %cst = arith.constant dense<0xFF800000> : vector<8xf32>
    %2 = vector.multi_reduction <maximumf>, %0, %cst [1] : vector<8x40xf32> to vector<8xf32>
    %3 = vector.shape_cast %2 : vector<8xf32> to vector<8x1xf32>
    %4 = vector.broadcast %3 : vector<8x1xf32> to vector<8x40xf32>
    %5 = arith.subf %0, %4 : vector<8x40xf32>
    %6 = tpu.iota {dimensions = array<i32: 1>} : vector<8x40xi32>
    %7 = vector.broadcast %1 : vector<8x1xi32> to vector<8x40xi32>
    %8 = arith.cmpi eq, %6, %7 : vector<8x40xi32>
    %cst_3 = arith.constant 0.000000e+00 : f32
    %9 = vector.broadcast %cst_3 : f32 to vector<8x40xf32>
    %10 = arith.select %8, %5, %9 : vector<8x40xi1>, vector<8x40xf32>
    %cst_4 = arith.constant dense<0.000000e+00> : vector<8xf32>
    %11 = vector.multi_reduction <add>, %10, %cst_4 [1] : vector<8x40xf32> to vector<8xf32>
    %12 = vector.shape_cast %11 : vector<8xf32> to vector<8x1xf32>
    %13 = math.exp %5 : vector<8x40xf32>
    %cst_5 = arith.constant dense<0.000000e+00> : vector<8xf32>
    %14 = vector.multi_reduction <add>, %13, %cst_5 [1] : vector<8x40xf32> to vector<8xf32>
    %15 = vector.shape_cast %14 : vector<8xf32> to vector<8x1xf32>
    %16 = math.log %15 : vector<8x1xf32>
    %17 = arith.subf %16, %12 : vector<8x1xf32>
    %c0_6 = arith.constant 0 : index
    %c0_7 = arith.constant 0 : index
    %18 = vector.load %arg3[%c0_6, %c0_7] : memref<8x1xf32, #tpu.memory_space<vmem>>, vector<8x1xf32>
    tpu.vector_store %arg3[%c0_6, %c0_7], %17 {strides = array<i32>} : memref<8x1xf32, #tpu.memory_space<vmem>>, vector<8x1xf32>,
    return
  }
  func.func @transform_0(%arg0: i32) -> (i32, i32) {
    %c0_i32 = arith.constant 0 : i32
    %c0_i32_0 = arith.constant 0 : i32
    return %arg0, %c0_i32 : i32, i32
  }
  func.func @transform_1(%arg0: i32) -> (i32, i32) {
    %c0_i32 = arith.constant 0 : i32
    %c0_i32_0 = arith.constant 0 : i32
    return %arg0, %c0_i32 : i32, i32
  }
  func.func @transform_2(%arg0: i32) -> (i32, i32) {
    %c0_i32 = arith.constant 0 : i32
    %c0_i32_0 = arith.constant 0 : i32
    return %arg0, %c0_i32 : i32, i32
  }
}

</mosaic_0001>

<llo_original>
// kernel: tpu_custom_call.1
$region0: #{tpu_custom_call.1}
  #allocation0 [shape = 'u32[]', space=smem, size = 0x4, offset = 0x4, fixed_abs, tag = 'smem constant byte address 0x4 - core index']
  #allocation1 [shape = 'u32[144,128]{1,0:T(1,128)}', space=vmem, size = 0x12000, scoped, tag = 'internal scratch']
  %s0 = inlined_call_operand.vmem [shape: f32[8,40], index: 0, kind: input, shape index: {}]
  %s1 = inlined_call_operand.vmem [shape: s32[8,1], index: 1, kind: input, shape index: {}]
  %s2 = inlined_call_operand.vmem [shape: f32[8,1], index: 2, kind: output, shape index: {}]
  %s3 = sld [smem:[#allocation0]]
  $region18: #{tpu_custom_call.1} parent=0
    _
  %s5 = ssub.s32 1, %s3
  %s6 = scalar_select 0, %s5, %s3
  // Predicated region
  $region2: #{tpu_custom_call.1} parent=0 // pred_check
    _
  $region3: #{tpu_custom_call.1} parent=0 // pred_check_branch
    %8 = sbr.rel (0) target = $region5
  $region4: #{tpu_custom_call.1} parent=0 // pred_region
    _
  $region5: #{tpu_custom_call.1} parent=0 // pred_fallthru
    _
  // Predicated region
  $region6: #{tpu_custom_call.1} parent=0 // pred_check
    _
  $region7: #{tpu_custom_call.1} parent=0 // pred_check_branch
    %10 = sbr.rel (0) target = $region9
  $region8: #{tpu_custom_call.1} parent=0 // pred_region
    _
  $region9: #{tpu_custom_call.1} parent=0 // pred_fallthru
    _
  %v11 = vld [vmem:[%s0] sm:$0xff]
  %v12 = vld [vmem:[%s1] sm:$0xff]
  %vm13 = vcmask 326656
  %v14 = vsel %vm13, %v11, -inf
  %15 = vmax.xlane.f32.xlu0 %v14
  %v16 = vpop.xlane.xlu0 %15
  %v17 = vsub.f32 %v11, %v16
  %v18 = vlaneseq
  %v19 = vand.u32 %v18, 127
  %20 = vset.pattern.permute.xlu0 0
  %21 = vperm.xlu0 %20, %v12
  %v22 = vpop.permute.xlu0 %21
  %vm23 = vcmp.eq.s32.totalorder %v19, %v22
  %v24 = vsel %vm23, %v17, 0.0
  %v25 = vsel %vm13, %v24, 0.0
  %26 = vadd.xlane.f32.xlu0 %v25
  %v27 = vpop.xlane.xlu0 %26
  %v28 = vmul.f32 %v17, 1.442695
  %v29 = vpow.pop %v28
  %v30 = vsel %vm13, %v29, 0.0
  %31 = vadd.xlane.f32.xlu0 %v30
  %v32 = vpop.xlane.xlu0 %31
  %v33 = vlog2.pop %v32
  %v34 = vmul.f32 %v33, 0.6931472
  %v35 = vsub.f32 %v34, %v27
  %vm36 = vcmask 7168
  %37 = vst.msk [vmem:[%s2] sm:$0xff] %vm36, %v35
  // Predicated region
  $region10: #{tpu_custom_call.1} parent=0 // pred_check
    _
  $region11: #{tpu_custom_call.1} parent=0 // pred_check_branch
    %39 = sbr.rel (0) target = $region13
  $region12: #{tpu_custom_call.1} parent=0 // pred_region
    _
  $region13: #{tpu_custom_call.1} parent=0 // pred_fallthru
    _
  // Predicated region
  $region14: #{tpu_custom_call.1} parent=0 // pred_check
    _
  $region15: #{tpu_custom_call.1} parent=0 // pred_check_branch
    %41 = sbr.rel (0) target = $region17
  $region16: #{tpu_custom_call.1} parent=0 // pred_region
    _
  $region17: #{tpu_custom_call.1} parent=0 // pred_fallthru
    _

</llo_original>
